<compile_context>
chip_gen: v7x
topology: tpu7x:2x2x1
jax: 0.10.0
libtpu: 0.0.40
codegen_flags: <defaults>
</compile_context>

<pallas_src>
import functools
import math

import jax
import jax.numpy as jnp
from jax.experimental import pallas as pl
from jax.experimental.pallas import tpu as pltpu


# ---------------------------------------------------------------------------
# helpers
# ---------------------------------------------------------------------------
def _round_up(x, m):
    return ((x + m - 1) // m) * m


@functools.lru_cache(maxsize=None)
def _vmem_cap():
    try:
        return int(pltpu.get_tpu_info().vmem_capacity_bytes)
    except Exception:
        return 64 * 1024 * 1024          # conservative (v7x per-TC VMEM)


def _vmem_limit(block_bytes):
    cap = _vmem_cap()
    want = 2 * int(block_bytes) + 4 * 1024 * 1024
    hi = cap * 3 // 4                    # leave headroom for Mosaic scratch
    return int(max(32 * 1024 * 1024, min(want, hi)))


def _matmul_tile_caps():
    # larger tiles on 128 MiB-VMEM parts (v5e/v6e), tighter on v7x (64 MiB)
    if _vmem_cap() >= 96 * 1024 * 1024:
        return 512, 512, 1024
    return 256, 256, 512


def _pick_tile(extent, max_tile, align):
    """Largest tile <= max_tile, multiple of `align`, dividing `extent`.
    `extent` is always a multiple of `align` by construction."""
    t = max(align, (min(max_tile, extent) // align) * align)
    while extent % t != 0:
        t -= align
    return t


# ---------------------------------------------------------------------------
# Tiled linear:  out = [relu]( [LN](x) @ w + b ) [+ residual]
#   grid = (M/tm, N/tn, K/tk); bf16 MXU operands, f32 VMEM accumulator.
#   Optional pre-norm LayerNorm fused into the prologue (single K block).
# ---------------------------------------------------------------------------
def _linear_kernel(*refs, apply_relu, has_residual, has_ln, d_true, eps):
    x_ref, w_ref, b_ref = refs[0], refs[1], refs[2]
    pos = 3
    if has_ln:
        g_ref, bt_ref = refs[pos], refs[pos + 1]
        pos += 2
    if has_residual:
        r_ref = refs[pos]
        pos += 1
    o_ref, acc_ref = refs[pos], refs[pos + 1]

    @pl.when(pl.program_id(2) == 0)
    def _():
        acc_ref[...] = jnp.zeros_like(acc_ref)

    x = x_ref[...]
    if has_ln:
        # LayerNorm over the true feature dim (padded cols of x are zero;
        # gamma/beta are zero-padded so padded output columns stay zero).
        inv_d = 1.0 / d_true
        mu = jnp.sum(x, axis=-1, keepdims=True) * inv_d
        lane = jax.lax.broadcasted_iota(jnp.int32, x.shape, 1)
        xc = jnp.where(lane < d_true, x - mu, 0.0)
        var = jnp.sum(xc * xc, axis=-1, keepdims=True) * inv_d
        x = xc * jax.lax.rsqrt(var + eps) * g_ref[...] + bt_ref[...]

    acc_ref[...] += jnp.dot(x.astype(jnp.bfloat16),
                            w_ref[...].astype(jnp.bfloat16),
                            preferred_element_type=jnp.float32)

    @pl.when(pl.program_id(2) == pl.num_programs(2) - 1)
    def _():
        out = acc_ref[...] + b_ref[...]
        if apply_relu:
            out = jnp.maximum(out, 0.0)
        if has_residual:
            out = out + r_ref[...]
        o_ref[...] = out.astype(o_ref.dtype)


def pallas_linear(x, w, b, residual=None, apply_relu=False, ln=None, eps=1e-5):
    """x: (M, K) f32 (M % 8 == 0, K % 128 == 0, zero-padded feature cols),
    w: (K, N) bf16 pre-padded at init, b: (N,) f32 (N % 128 == 0),
    ln: optional (gamma(1,K), beta(1,K), true_dim) fused into the prologue."""
    M, K = x.shape
    N = w.shape[1]
    tm_max, tn_max, tk_max = _matmul_tile_caps()

    if ln is not None and K > 2048:
        # K too large to hold as one block: fall back to standalone LayerNorm.
        g, bt, dt = ln
        x = pallas_layernorm(x, g, bt, d_true=dt, eps=eps)
        ln = None

    has_ln = ln is not None
    d_true = 0
    tm = _pick_tile(M, tm_max, 8)
    tn = _pick_tile(N, tn_max, 128)
    tk = K if has_ln else _pick_tile(K, tk_max, 128)

    inputs = [x, w, b.reshape(1, N)]
    in_specs = [
        pl.BlockSpec((tm, tk), lambda i, j, k: (i, k)),
        pl.BlockSpec((tk, tn), lambda i, j, k: (k, j)),
        pl.BlockSpec((1, tn), lambda i, j, k: (0, j)),
    ]
    if has_ln:
        g, bt, d_true = ln
        inputs += [g, bt]
        in_specs += [pl.BlockSpec((1, tk), lambda i, j, k: (0, k)),
                     pl.BlockSpec((1, tk), lambda i, j, k: (0, k))]
    if residual is not None:
        inputs.append(residual)
        in_specs.append(pl.BlockSpec((tm, tn), lambda i, j, k: (i, j)))

    block_bytes = (4 * tm * tk + 2 * tk * tn + 4 * tn + 8 * tk
                   + (4 * tm * tn if residual is not None else 0)
                   + 8 * tm * tn)
    kernel = functools.partial(
        _linear_kernel, apply_relu=apply_relu,
        has_residual=residual is not None, has_ln=has_ln,
        d_true=d_true, eps=eps)
    return pl.pallas_call(
        kernel,
        out_shape=jax.ShapeDtypeStruct((M, N), jnp.float32),
        grid=(M // tm, N // tn, K // tk),
        in_specs=in_specs,
        out_specs=pl.BlockSpec((tm, tn), lambda i, j, k: (i, j)),
        scratch_shapes=[pltpu.VMEM((tm, tn), jnp.float32)],
        compiler_params=pltpu.CompilerParams(
            dimension_semantics=("parallel", "parallel", "arbitrary"),
            vmem_limit_bytes=_vmem_limit(block_bytes)),
    )(*inputs)


# ---------------------------------------------------------------------------
# Standalone row-tiled LayerNorm (final norm / fallback only).
# ---------------------------------------------------------------------------
def _layernorm_kernel(x_ref, g_ref, b_ref, o_ref, *, eps, d_true):
    x = x_ref[...]
    inv_d = 1.0 / d_true
    mu = jnp.sum(x, axis=-1, keepdims=True) * inv_d
    lane = jax.lax.broadcasted_iota(jnp.int32, x.shape, 1)
    xc = jnp.where(lane < d_true, x - mu, 0.0)
    var = jnp.sum(xc * xc, axis=-1, keepdims=True) * inv_d
    o_ref[...] = xc * jax.lax.rsqrt(var + eps) * g_ref[...] + b_ref[...]


def pallas_layernorm(x, gamma, beta, d_true, eps=1e-5):
    """x: (M, Dp) f32 with zero-padded cols beyond d_true; gamma/beta (1, Dp)."""
    M, Dp = x.shape
    tm = _pick_tile(M, 512, 8)
    return pl.pallas_call(
        functools.partial(_layernorm_kernel, eps=eps, d_true=d_true),
        out_shape=jax.ShapeDtypeStruct((M, Dp), x.dtype),
        grid=(M // tm,),
        in_specs=[pl.BlockSpec((tm, Dp), lambda i: (i, 0)),
                  pl.BlockSpec((1, Dp), lambda i: (0, 0)),
                  pl.BlockSpec((1, Dp), lambda i: (0, 0))],
        out_specs=pl.BlockSpec((tm, Dp), lambda i: (i, 0)),
        compiler_params=pltpu.CompilerParams(
            dimension_semantics=("parallel",),
            vmem_limit_bytes=_vmem_limit(4 * (2 * tm * Dp + 2 * Dp))),
    )(x, gamma, beta)


# ---------------------------------------------------------------------------
# Scaled-dot-product attention, flash-style online softmax.
#   grid = (batch, head_group, kv_tile); per-group 128-lane q/k/v bands are
#   read directly from the fused QKV projection and ctx is written directly
#   into the (B*T, D) layout consumed by the output projection.
# ---------------------------------------------------------------------------
def _sdpa_kernel(len_ref, q_ref, k_ref, v_ref, *rest,
                 Tp, tkl, HD, GW, hpg, rpe_k, has_rpe):
    if has_rpe:
        rq_ref, rv_ref, ctx_ref, m_ref, l_ref, acc_ref = rest
    else:
        ctx_ref, m_ref, l_ref, acc_ref = rest

    b = pl.program_id(0)
    kl = pl.program_id(2)

    @pl.when(kl == 0)
    def _():
        m_ref[...] = jnp.full((hpg, Tp, 1), -1e30, jnp.float32)
        l_ref[...] = jnp.zeros((hpg, Tp, 1), jnp.float32)
        acc_ref[...] = jnp.zeros((hpg, Tp, HD), jnp.float32)

    q = q_ref[...]          # (Tp, GW)  f32; 1/sqrt(HD) already folded into Wq
    k = k_ref[...]          # (tkl, GW)
    v = v_ref[...]          # (tkl, GW)

    # key-padding mask + clipped relative distance, built in-kernel.
    kpos = kl * tkl + jax.lax.broadcasted_iota(jnp.int32, (Tp, tkl), 1)
    valid = kpos < len_ref[b]
    if has_rpe:
        qpos = jax.lax.broadcasted_iota(jnp.int32, (Tp, tkl), 0)
        dmat = jnp.clip(qpos - kpos, -rpe_k, rpe_k) + rpe_k
        rq = rq_ref[...]    # (2k+1, HD)
        rv = rv_ref[...]    # (2k+1, HD)
        n_rel = 2 * rpe_k + 1

    for i in range(hpg):
        qh = q[:, i * HD:(i + 1) * HD]
        kh = k[:, i * HD:(i + 1) * HD]
        vh = v[:, i * HD:(i + 1) * HD]

        s = jax.lax.dot_general(
            qh.astype(jnp.bfloat16), kh.astype(jnp.bfloat16),
            (((1,), (1,)), ((), ())), preferred_element_type=jnp.float32)
        if has_rpe:
            # energy += einsum('qd,qkd->qk', q, rpe_q): tiny MXU matmul to the
            # (Tp, 2k+1) bucket space, then select by clipped distance.
            sq = jax.lax.dot_general(qh, rq, (((1,), (1,)), ((), ())),
                                     preferred_element_type=jnp.float32)
            radd = jnp.zeros_like(s)
            for r in range(n_rel):
                radd = radd + jnp.where(dmat == r, sq[:, r:r + 1], 0.0)
            s = s + radd
        s = jnp.where(valid, s, -1e30)

        m_old = m_ref[i]
        l_old = l_ref[i]
        m_new = jnp.maximum(m_old, jnp.max(s, axis=-1, keepdims=True))
        alpha = jnp.exp(m_old - m_new)
        p = jnp.exp(s - m_new)
        l_new = alpha * l_old + jnp.sum(p, axis=-1, keepdims=True)

        pv = jax.lax.dot_general(
            p.astype(jnp.bfloat16), vh.astype(jnp.bfloat16),
            (((1,), (0,)), ((), ())), preferred_element_type=jnp.float32)
        if has_rpe:
            # context += einsum('qk,qkd->qd', p, rpe_v): scatter p onto the
            # 2k+1 relative buckets, then (Tp, 2k+1) @ (2k+1, HD) on the MXU.
            cols = [jnp.sum(jnp.where(dmat == r, p, 0.0),
                            axis=-1, keepdims=True) for r in range(n_rel)]
            p2 = jnp.concatenate(cols, axis=-1)
            pv = pv + jax.lax.dot_general(p2, rv, (((1,), (0,)), ((), ())),
                                          preferred_element_type=jnp.float32)

        acc_ref[i] = alpha * acc_ref[i] + pv
        m_ref[i] = m_new
        l_ref[i] = l_new

    @pl.when(kl == pl.num_programs(2) - 1)
    def _():
        parts = [acc_ref[i] * pl.reciprocal(l_ref[i], approx=True)
                 for i in range(hpg)]
        if GW > hpg * HD:
            parts.append(jnp.zeros((Tp, GW - hpg * HD), jnp.float32))
        ctx_ref[...] = jnp.concatenate(parts, axis=-1).astype(ctx_ref.dtype)


def pallas_sdpa(qkv, lengths, B, Tp, heads, hpg, GW, HD, rpe_k,
                rpe_q_emb=None, rpe_v_emb=None):
    """qkv: (B*Tp, 3*NG*GW) f32 in head-group-banded [q|k|v] layout.
    lengths: (B,) int32.  Returns context (B*Tp, NG*GW) f32 (same banding)."""
    NG = heads // hpg
    tkl = Tp
    for cand in (512, 256, 128):
        if Tp > cand and Tp % cand == 0:
            tkl = cand
            break
    KT = Tp // tkl
    has_rpe = rpe_q_emb is not None

    in_specs = [
        pl.BlockSpec((Tp, GW), lambda b, g, kl, lens: (b, g)),
        pl.BlockSpec((tkl, GW), lambda b, g, kl, lens: (b * KT + kl, NG + g)),
        pl.BlockSpec((tkl, GW), lambda b, g, kl, lens: (b * KT + kl, 2 * NG + g)),
    ]
    inputs = [qkv, qkv, qkv]
    if has_rpe:
        R = 2 * rpe_k + 1
        in_specs += [pl.BlockSpec((R, HD), lambda b, g, kl, lens: (0, 0)),
                     pl.BlockSpec((R, HD), lambda b, g, kl, lens: (0, 0))]
        inputs += [rpe_q_emb, rpe_v_emb]

    block_bytes = (4 * (2 * Tp * GW + 2 * tkl * GW)
                   + 4 * hpg * Tp * (HD + 2)
                   + 12 * Tp * tkl)
    kernel = functools.partial(_sdpa_kernel, Tp=Tp, tkl=tkl, HD=HD, GW=GW,
                               hpg=hpg, rpe_k=rpe_k, has_rpe=has_rpe)
    return pl.pallas_call(
        kernel,
        out_shape=jax.ShapeDtypeStruct((B * Tp, NG * GW), jnp.float32),
        grid_spec=pltpu.PrefetchScalarGridSpec(
            num_scalar_prefetch=1,
            grid=(B, NG, KT),
            in_specs=in_specs,
            out_specs=pl.BlockSpec((Tp, GW), lambda b, g, kl, lens: (b, g)),
            scratch_shapes=[pltpu.VMEM((hpg, Tp, 1), jnp.float32),
                            pltpu.VMEM((hpg, Tp, 1), jnp.float32),
                            pltpu.VMEM((hpg, Tp, HD), jnp.float32)]),
        compiler_params=pltpu.CompilerParams(
            dimension_semantics=("parallel", "parallel", "arbitrary"),
            vmem_limit_bytes=_vmem_limit(block_bytes)),
    )(lengths, *inputs)


# ---------------------------------------------------------------------------
# TransformerEncoder (forward only).
# ---------------------------------------------------------------------------
class TransformerEncoderPallas:
    def __init__(self, dim, heads, num_layers, dropout=0.1, rpe_k=8, key=None):
        assert dim % heads == 0
        self.dim = dim
        self.heads = heads
        self.head_dim = dim // heads
        self.num_layers = num_layers
        self.rpe_k = rpe_k
        # TODO(synk): nn.Dropout is identity here (inference-mode forward only).

        HD = self.head_dim
        if HD >= 128:
            self.hpg = 1
            self.gw = _round_up(HD, 128)
        else:
            hpg = min(heads, max(1, 128 // HD))
            while hpg > 1 and heads % hpg != 0:
                hpg -= 1
            self.hpg = hpg
            self.gw = 128
        self.num_groups = heads // self.hpg
        self.slot_w = self.num_groups * self.gw
        self.dp = _round_up(dim, 128)
        self.fp = _round_up(4 * dim, 128)

        if key is None:
            key = jax.random.PRNGKey(42)

        def linear_init(k, fan_in, fan_out):
            kw, kb = jax.random.split(k)
            bound = 1.0 / math.sqrt(fan_in)
            w = jax.random.uniform(kw, (fan_in, fan_out), jnp.float32, -bound, bound)
            bb = jax.random.uniform(kb, (fan_out,), jnp.float32, -bound, bound)
            return w, bb

        self.layers = []
        for _ in range(num_layers):
            key, *ks = jax.random.split(key, 12)
            p = {}
            p['wq'], p['bq'] = linear_init(ks[0], dim, dim)
            p['wk'], p['bk'] = linear_init(ks[1], dim, dim)
            p['wv'], p['bv'] = linear_init(ks[2], dim, dim)
            p['wo'], p['bo'] = linear_init(ks[3], dim, dim)
            p['w1'], p['b1'] = linear_init(ks[4], dim, 4 * dim)
            p['w2'], p['b2'] = linear_init(ks[5], 4 * dim, dim)
            p['ln1_g'] = 1.0 + 0.1 * jax.random.normal(ks[6], (dim,), jnp.float32)
            p['ln1_b'] = 0.1 * jax.random.normal(ks[7], (dim,), jnp.float32)
            p['ln2_g'] = 1.0 + 0.1 * jax.random.normal(ks[8], (dim,), jnp.float32)
            p['ln2_b'] = 0.1 * jax.random.normal(ks[9], (dim,), jnp.float32)
            if rpe_k > 0:
                p['rpe_emb'] = jax.random.normal(
                    ks[10], (2 * rpe_k + 1, 2 * self.head_dim), jnp.float32)
            self._pack_layer(p)
            self.layers.append(p)

        key, k1, k2 = jax.random.split(key, 3)
        self.lnf_g = 1.0 + 0.1 * jax.random.normal(k1, (dim,), jnp.float32)
        self.lnf_b = 0.1 * jax.random.normal(k2, (dim,), jnp.float32)
        self.lnf_g_p = self._pad_vec(self.lnf_g).reshape(1, self.dp)
        self.lnf_b_p = self._pad_vec(self.lnf_b).reshape(1, self.dp)

    # ---- one-time weight packing / padding (hoisted out of the forward) ----
    def _pad_vec(self, v, width=None):
        width = self.dp if width is None else width
        return jnp.pad(v, (0, width - v.shape[0]))

    def _band_cols(self, w):
        HD, hpg, gw = self.head_dim, self.hpg, self.gw
        bands = []
        for g in range(self.num_groups):
            cols = [w[:, (g * hpg + i) * HD:(g * hpg + i + 1) * HD]
                    for i in range(hpg)]
            band = jnp.concatenate(cols, axis=1)
            if gw > hpg * HD:
                band = jnp.pad(band, ((0, 0), (0, gw - hpg * HD)))
            bands.append(band)
        return jnp.concatenate(bands, axis=1)

    def _band_rows(self, w):
        HD, hpg, gw = self.head_dim, self.hpg, self.gw
        bands = []
        for g in range(self.num_groups):
            rows = [w[(g * hpg + i) * HD:(g * hpg + i + 1) * HD, :]
                    for i in range(hpg)]
            band = jnp.concatenate(rows, axis=0)
            if gw > hpg * HD:
                band = jnp.pad(band, ((0, gw - hpg * HD), (0, 0)))
            bands.append(band)
        return jnp.concatenate(bands, axis=0)

    def _band_vec(self, v):
        HD, hpg, gw = self.head_dim, self.hpg, self.gw
        bands = []
        for g in range(self.num_groups):
            seg = jnp.concatenate([v[(g * hpg + i) * HD:(g * hpg + i + 1) * HD]
                                   for i in range(hpg)])
            if gw > hpg * HD:
                seg = jnp.pad(seg, (0, gw - hpg * HD))
            bands.append(seg)
        return jnp.concatenate(bands)

    def _pack_layer(self, p):
        D, dp, fp = self.dim, self.dp, self.fp
        scale = 1.0 / math.sqrt(self.head_dim)
        # fused head-banded QKV; attention scale folded into Wq/bq at init.
        wqkv = jnp.concatenate([self._band_cols(p['wq'] * scale),
                                self._band_cols(p['wk']),
                                self._band_cols(p['wv'])], axis=1)
        p['wqkv_p'] = jnp.pad(wqkv, ((0, dp - D), (0, 0))).astype(jnp.bfloat16)
        p['bqkv_p'] = jnp.concatenate([self._band_vec(p['bq'] * scale),
                                       self._band_vec(p['bk']),
                                       self._band_vec(p['bv'])])
        # output projection consumes the banded context layout directly.
        wo = jnp.pad(self._band_rows(p['wo']), ((0, 0), (0, dp - D)))
        p['wo_p'] = wo.astype(jnp.bfloat16)
        p['bo_p'] = self._pad_vec(p['bo'])
        # FFN
        F = 4 * D
        p['w1_p'] = jnp.pad(p['w1'], ((0, dp - D), (0, fp - F))).astype(jnp.bfloat16)
        p['b1_p'] = jnp.pad(p['b1'], (0, fp - F))
        p['w2_p'] = jnp.pad(p['w2'], ((0, fp - F), (0, dp - D))).astype(jnp.bfloat16)
        p['b2_p'] = self._pad_vec(p['b2'])
        # LayerNorm params zero-padded so padded feature columns stay zero.
        p['ln1_g_p'] = self._pad_vec(p['ln1_g']).reshape(1, dp)
        p['ln1_b_p'] = self._pad_vec(p['ln1_b']).reshape(1, dp)
        p['ln2_g_p'] = self._pad_vec(p['ln2_g']).reshape(1, dp)
        p['ln2_b_p'] = self._pad_vec(p['ln2_b']).reshape(1, dp)
        if self.rpe_k > 0:
            p['rpe_q_emb'] = p['rpe_emb'][:, :self.head_dim]
            p['rpe_v_emb'] = p['rpe_emb'][:, self.head_dim:]

    @staticmethod
    def relative_distance(length, k):
        idx = jnp.arange(length)
        dist = idx[:, None] - idx[None, :]
        return jnp.clip(dist, -k, k) + k

    # ---- forward ----
    def _layer(self, p, x2, lengths, B, Tp):
        # attention sub-layer: x + Wo(SDPA(QKV(LN1(x))))   (LN1 fused in QKV)
        qkv = pallas_linear(x2, p['wqkv_p'], p['bqkv_p'],
                            ln=(p['ln1_g_p'], p['ln1_b_p'], self.dim))
        ctx = pallas_sdpa(qkv, lengths, B, Tp, self.heads, self.hpg, self.gw,
                          self.head_dim, self.rpe_k,
                          p.get('rpe_q_emb'), p.get('rpe_v_emb'))
        x2 = pallas_linear(ctx, p['wo_p'], p['bo_p'], residual=x2)
        # feed-forward sub-layer: x + W2(relu(W1(LN2(x))))  (LN2 fused in W1)
        h = pallas_linear(x2, p['w1_p'], p['b1_p'], apply_relu=True,
                          ln=(p['ln2_g_p'], p['ln2_b_p'], self.dim))
        x2 = pallas_linear(h, p['w2_p'], p['b2_p'], residual=x2)
        return x2

    def __call__(self, x, lengths=None):
        B, T, D = x.shape
        assert D == self.dim
        if lengths is None:
            # torch: list(map(len, x)) == [T] * B for a padded (B, T, D) tensor
            lengths = jnp.full((B,), T, dtype=jnp.int32)
        lengths = lengths.astype(jnp.int32)
        Tp = _round_up(T, 8)
        # pad once: seq to a sublane multiple, features to 128 lanes (zeros).
        xp = jnp.pad(x, ((0, 0), (0, Tp - T), (0, self.dp - D)))
        x2 = xp.reshape(B * Tp, self.dp)
        for p in self.layers:
            x2 = self._layer(p, x2, lengths, B, Tp)
        x2 = pallas_layernorm(x2, self.lnf_g_p, self.lnf_b_p, d_true=self.dim)
        return x2.reshape(B, Tp, self.dp)[:, :T, :D]


# ---------------------------------------------------------------------------
# Pure-JAX reference (mirrors the PyTorch module, high matmul precision).
# ---------------------------------------------------------------------------
def reference_encoder(model, x, lengths):
    PREC = jax.lax.Precision.HIGHEST
    B, T, D = x.shape
    H, HD = model.heads, model.head_dim
    key_mask = (jnp.arange(T)[None, :] >= lengths[:, None])[:, None, None, :]

    def ln(v, g, b):
        mu = jnp.mean(v, axis=-1, keepdims=True)
        var = jnp.mean((v - mu) ** 2, axis=-1, keepdims=True)
        return (v - mu) / jnp.sqrt(var + 1e-5) * g + b

    def lin(v, w, b):
        return jnp.dot(v, w, precision=PREC) + b

    if model.rpe_k > 0:
        dist = model.relative_distance(T, model.rpe_k)

    for p in model.layers:
        h = ln(x, p['ln1_g'], p['ln1_b'])
        q = lin(h, p['wq'], p['bq'])
        k = lin(h, p['wk'], p['bk'])
        v = lin(h, p['wv'], p['bv'])
        split = lambda t: t.reshape(B, T, H, HD).transpose(0, 2, 1, 3)
        qh, kh, vh = split(q), split(k), split(v)
        qh = qh / (HD ** 0.5)
        energy = jnp.einsum('bhqd,bhkd->bhqk', qh, kh, precision=PREC)
        if model.rpe_k > 0:
            rpe = p['rpe_emb'][dist]
            rpe_q, rpe_v = rpe[..., :HD], rpe[..., HD:]
            energy = energy + jnp.einsum('bhqd,qkd->bhqk', qh, rpe_q, precision=PREC)
        energy = jnp.where(key_mask, -jnp.inf, energy)
        align = jax.nn.softmax(energy, axis=-1)
        ctx = jnp.einsum('bhqk,bhkd->bhqd', align, vh, precision=PREC)
        if model.rpe_k > 0:
            ctx = ctx + jnp.einsum('bhqk,qkd->bhqd', align, rpe_v, precision=PREC)
        ctx = ctx.transpose(0, 2, 1, 3).reshape(B, T, D)
        x = x + lin(ctx, p['wo'], p['bo'])
        h = ln(x, p['ln2_g'], p['ln2_b'])
        x = x + lin(jnp.maximum(lin(h, p['w1'], p['b1']), 0.0), p['w2'], p['b2'])
    return ln(x, model.lnf_g, model.lnf_b)


if __name__ == "__main__":
    B, T, DIM, HEADS, LAYERS, RPE_K = 2, 8, 32, 4, 2, 8

    root = jax.random.PRNGKey(0)
    kx, kparam = jax.random.split(root)
    x = jax.random.normal(kx, (B, T, DIM), jnp.float32)
    lengths = jnp.array([T, 5], dtype=jnp.int32)   # second sequence is padded

    enc = TransformerEncoderPallas(DIM, HEADS, LAYERS, dropout=0.1,
                                   rpe_k=RPE_K, key=kparam)

    out = enc(x, lengths)
    out = jax.block_until_ready(out)

    ref = reference_encoder(enc, x, lengths)
    assert out.shape == (B, T, DIM)
    assert bool(jnp.all(jnp.isfinite(out)))
    max_err = float(jnp.max(jnp.abs(out - ref)))
    # bf16 MXU operands + approx reciprocal => tolerance a bit looser than f32
    assert max_err < 5e-2, f"max abs error vs reference: {max_err}"
    print("KERNEL_OK")
</pallas_src>

<mosaic_0001>
module attributes {stable_mosaic.version = 11 : i64} {
  func.func @_linear_kernel(%arg0: i32, %arg1: i32, %arg2: i32, %arg3: memref<16x128xf32, #tpu.memory_space<vmem>>, %arg4: memref<128x128xbf16, #tpu.memory_space<vmem>>, %arg5: memref<1x128xf32, #tpu.memory_space<vmem>>, %arg6: memref<1x128xf32, #tpu.memory_space<vmem>>, %arg7: memref<1x128xf32, #tpu.memory_space<vmem>>, %arg8: memref<16x128xf32, #tpu.memory_space<vmem>>, %arg9: memref<16x128xf32, #tpu.memory_space<vmem>>) attributes {dimension_semantics = [#tpu.dimension_semantics<parallel>, #tpu.dimension_semantics<parallel>, #tpu.dimension_semantics<arbitrary>], iteration_bounds = array<i64: 1, 3, 1>, scalar_prefetch = 0 : i64, scratch_operands = 1 : i64, tpu.core_type = #tpu.core_type<tc>, window_params = [{transform_indices = @transform_0, window_bounds = array<i64: 16, 128>}, {transform_indices = @transform_1, window_bounds = array<i64: 128, 128>}, {transform_indices = @transform_2, window_bounds = array<i64: 1, 128>}, {transform_indices = @transform_3, window_bounds = array<i64: 1, 128>}, {transform_indices = @transform_4, window_bounds = array<i64: 1, 128>}, {transform_indices = @transform_5, window_bounds = array<i64: 16, 128>}]} {
    %c0_i32 = arith.constant 0 : i32
    %0 = arith.cmpi eq, %arg2, %c0_i32 : i32
    %1 = arith.extui %0 : i1 to i32
    %c0_i32_0 = arith.constant 0 : i32
    %2 = arith.cmpi ne, %1, %c0_i32_0 : i32
    scf.if %2 {
      %cst_20 = arith.constant 0.000000e+00 : f32
      %40 = vector.broadcast %cst_20 : f32 to vector<16x128xf32>
      %c0_21 = arith.constant 0 : index
      %c0_22 = arith.constant 0 : index
      %41 = vector.load %arg9[%c0_21, %c0_22] : memref<16x128xf32, #tpu.memory_space<vmem>>, vector<16x128xf32>
      tpu.vector_store %arg9[%c0_21, %c0_22], %40 {strides = array<i32>} : memref<16x128xf32, #tpu.memory_space<vmem>>, vector<16x128xf32>,
    } else {
    }
    %c0 = arith.constant 0 : index
    %c0_1 = arith.constant 0 : index
    %3 = vector.load %arg3[%c0, %c0_1] : memref<16x128xf32, #tpu.memory_space<vmem>>, vector<16x128xf32>
    %cst = arith.constant dense<0.000000e+00> : vector<16xf32>
    %4 = vector.multi_reduction <add>, %3, %cst [1] : vector<16x128xf32> to vector<16xf32>
    %5 = vector.shape_cast %4 : vector<16xf32> to vector<16x1xf32>
    %cst_2 = arith.constant 3.125000e-02 : f32
    %6 = vector.broadcast %cst_2 : f32 to vector<16x1xf32>
    %7 = arith.mulf %5, %6 : vector<16x1xf32>
    %8 = tpu.iota {dimensions = array<i32: 1>} : vector<16x128xi32>
    %c32_i32 = arith.constant 32 : i32
    %9 = vector.broadcast %c32_i32 : i32 to vector<16x128xi32>
    %10 = arith.cmpi slt, %8, %9 : vector<16x128xi32>
    %11 = vector.broadcast %7 : vector<16x1xf32> to vector<16x128xf32>
    %12 = arith.subf %3, %11 : vector<16x128xf32>
    %cst_3 = arith.constant 0.000000e+00 : f32
    %13 = vector.broadcast %cst_3 : f32 to vector<16x128xf32>
    %14 = arith.select %10, %12, %13 : vector<16x128xi1>, vector<16x128xf32>
    %15 = arith.mulf %14, %14 : vector<16x128xf32>
    %cst_4 = arith.constant dense<0.000000e+00> : vector<16xf32>
    %16 = vector.multi_reduction <add>, %15, %cst_4 [1] : vector<16x128xf32> to vector<16xf32>
    %17 = vector.shape_cast %16 : vector<16xf32> to vector<16x1xf32>
    %cst_5 = arith.constant 3.125000e-02 : f32
    %18 = vector.broadcast %cst_5 : f32 to vector<16x1xf32>
    %19 = arith.mulf %17, %18 : vector<16x1xf32>
    %cst_6 = arith.constant 9.99999974E-6 : f32
    %20 = vector.broadcast %cst_6 : f32 to vector<16x1xf32>
    %21 = arith.addf %19, %20 : vector<16x1xf32>
    %22 = math.rsqrt %21 : vector<16x1xf32>
    %23 = vector.broadcast %22 : vector<16x1xf32> to vector<16x128xf32>
    %24 = arith.mulf %14, %23 : vector<16x128xf32>
    %c0_7 = arith.constant 0 : index
    %c0_8 = arith.constant 0 : index
    %25 = vector.load %arg6[%c0_7, %c0_8] : memref<1x128xf32, #tpu.memory_space<vmem>>, vector<1x128xf32>
    %26 = vector.broadcast %25 : vector<1x128xf32> to vector<16x128xf32>
    %27 = arith.mulf %24, %26 : vector<16x128xf32>
    %c0_9 = arith.constant 0 : index
    %c0_10 = arith.constant 0 : index
    %28 = vector.load %arg7[%c0_9, %c0_10] : memref<1x128xf32, #tpu.memory_space<vmem>>, vector<1x128xf32>
    %29 = vector.broadcast %28 : vector<1x128xf32> to vector<16x128xf32>
    %30 = arith.addf %27, %29 : vector<16x128xf32>
    %c0_11 = arith.constant 0 : index
    %c0_12 = arith.constant 0 : index
    %31 = vector.load %arg9[%c0_11, %c0_12] : memref<16x128xf32, #tpu.memory_space<vmem>>, vector<16x128xf32>
    %32 = arith.truncf %30 : vector<16x128xf32> to vector<16x128xbf16>
    %c0_13 = arith.constant 0 : index
    %c0_14 = arith.constant 0 : index
    %33 = vector.load %arg4[%c0_13, %c0_14] : memref<128x128xbf16, #tpu.memory_space<vmem>>, vector<128x128xbf16>
    %cst_15 = arith.constant dense<0.000000e+00> : vector<16x128xf32>
    %34 = tpu.matmul %32, %33, %cst_15 {dimension_numbers = #tpu.dot_dimension_numbers<[1], [0], [0], [1], [0, 0, 1, 1], [], []>} : vector<16x128xbf16>, vector<128x128xbf16>, vector<16x128xf32> -> vector<16x128xf32>
    %35 = arith.addf %31, %34 : vector<16x128xf32>
    %c0_16 = arith.constant 0 : index
    %c0_17 = arith.constant 0 : index
    %36 = vector.load %arg9[%c0_16, %c0_17] : memref<16x128xf32, #tpu.memory_space<vmem>>, vector<16x128xf32>
    tpu.vector_store %arg9[%c0_16, %c0_17], %35 {strides = array<i32>} : memref<16x128xf32, #tpu.memory_space<vmem>>, vector<16x128xf32>,
    %c0_i32_18 = arith.constant 0 : i32
    %37 = arith.cmpi eq, %arg2, %c0_i32_18 : i32
    %38 = arith.extui %37 : i1 to i32
    %c0_i32_19 = arith.constant 0 : i32
    %39 = arith.cmpi ne, %38, %c0_i32_19 : i32
    scf.if %39 {
      %c0_20 = arith.constant 0 : index
      %c0_21 = arith.constant 0 : index
      %40 = vector.load %arg9[%c0_20, %c0_21] : memref<16x128xf32, #tpu.memory_space<vmem>>, vector<16x128xf32>
      %c0_22 = arith.constant 0 : index
      %c0_23 = arith.constant 0 : index
      %41 = vector.load %arg5[%c0_22, %c0_23] : memref<1x128xf32, #tpu.memory_space<vmem>>, vector<1x128xf32>
      %42 = vector.broadcast %41 : vector<1x128xf32> to vector<16x128xf32>
      %43 = arith.addf %40, %42 : vector<16x128xf32>
      %c0_24 = arith.constant 0 : index
      %c0_25 = arith.constant 0 : index
      %44 = vector.load %arg8[%c0_24, %c0_25] : memref<16x128xf32, #tpu.memory_space<vmem>>, vector<16x128xf32>
      tpu.vector_store %arg8[%c0_24, %c0_25], %43 {strides = array<i32>} : memref<16x128xf32, #tpu.memory_space<vmem>>, vector<16x128xf32>,
    } else {
    }
    return
  }
  func.func @transform_0(%arg0: i32, %arg1: i32, %arg2: i32) -> (i32, i32) {
    %c0_i32 = arith.constant 0 : i32
    return %arg0, %arg2 : i32, i32
  }
  func.func @transform_1(%arg0: i32, %arg1: i32, %arg2: i32) -> (i32, i32) {
    %c0_i32 = arith.constant 0 : i32
    return %arg2, %arg1 : i32, i32
  }
  func.func @transform_2(%arg0: i32, %arg1: i32, %arg2: i32) -> (i32, i32) {
    %c0_i32 = arith.constant 0 : i32
    %c0_i32_0 = arith.constant 0 : i32
    return %c0_i32, %arg1 : i32, i32
  }
  func.func @transform_3(%arg0: i32, %arg1: i32, %arg2: i32) -> (i32, i32) {
    %c0_i32 = arith.constant 0 : i32
    %c0_i32_0 = arith.constant 0 : i32
    return %c0_i32, %arg2 : i32, i32
  }
  func.func @transform_4(%arg0: i32, %arg1: i32, %arg2: i32) -> (i32, i32) {
    %c0_i32 = arith.constant 0 : i32
    %c0_i32_0 = arith.constant 0 : i32
    return %c0_i32, %arg2 : i32, i32
  }
  func.func @transform_5(%arg0: i32, %arg1: i32, %arg2: i32) -> (i32, i32) {
    %c0_i32 = arith.constant 0 : i32
    return %arg0, %arg1 : i32, i32
  }
}

</mosaic_0001>

<llo_original>
// kernel: tpu_custom_call.1
$region0: #{tpu_custom_call.1}
  #allocation0 [shape = 'u32[]', space=smem, size = 0x4, offset = 0x4, fixed_abs, tag = 'smem constant byte address 0x4 - core index']
  #allocation1 [shape = 'u32[144,128]{1,0:T(1,128)}', space=vmem, size = 0x12000, scoped, tag = 'internal scratch']
  #allocation2 [shape = 'f32[16,128]{1,0:T(8,128)}', space=vmem, size = 0x2000, scoped, tag = 'scratch operand']
  %s0 = inlined_call_operand.hbm [shape: f32[16,128], index: 0, kind: input, shape index: {}]
  %s1 = inlined_call_operand.hbm [shape: bf16[128,384], index: 1, kind: input, shape index: {}]
  %s2 = inlined_call_operand.vmem [shape: f32[1,384], index: 2, kind: input, shape index: {}]
  %s3 = inlined_call_operand.vmem [shape: f32[1,128], index: 3, kind: input, shape index: {}]
  %s4 = inlined_call_operand.vmem [shape: f32[1,128], index: 4, kind: input, shape index: {}]
  %s5 = inlined_call_operand.hbm [shape: f32[16,384], index: 5, kind: output, shape index: {}]
  %s6 = sld [smem:[#allocation0]]
  $region69: #{tpu_custom_call.1} parent=0
    _
  %s8 = ssub.s32 1, %s6
  %s9 = scalar_select 0, %s8, %s6
  $region1: #{tpu_custom_call.1} parent=0
    #allocation3 [shape = 'u8[8192]{0}', space=vmem, size = 0x2000, scoped, tag = 'input window, operand 0, single buffered']
    #allocation4 [shape = 's32[2]{0}', space=sflag, size = 0x8, scoped, tag = 'scoped memory for tpu_custom_call.1']
    #allocation5 [shape = 's32[2]{0}', space=sflag, size = 0x8, scoped, tag = 'scoped memory for tpu_custom_call.1']
    #allocation6 [shape = 'u8[65536]{0}', space=vmem, size = 0x10000, scoped, tag = 'input window, operand 1']
    #allocation7 [shape = 's32[2]{0}', space=sflag, size = 0x8, scoped, tag = 'scoped memory for tpu_custom_call.1']
    #allocation8 [shape = 'u8[16384]{0}', space=vmem, size = 0x4000, scoped, tag = 'output window, operand 0']
    %10 = vsyncpa [#allocation4], 0
    %11 = vsyncpa [#allocation7], 0
    %s12 = scalar_lea.sflag [#allocation7], 1
    %13 = vsyncpa %s12, 0
    %14 = vsyncpa [#allocation5], 0
    %s15 = scalar_lea.sflag [#allocation5], 1
    %16 = vsyncpa %s15, 0
    loop: start=0, step=1, limit=5
    $region2: #{tpu_custom_call.1} parent=1 // loop_pre_header
      _
    $region3: #{tpu_custom_call.1} parent=1 // loop_header
      %s18 = sphi 0, %s22
      %p19 = scmp.ge.s32.totalorder %s18, 5
      %s25 = sphi 0, %s44
      %s26 = sphi 0, %s40
      %s27 = sphi 0, %s36
      %s28 = sphi 0, %s25
      %s29 = sphi 0, %s26
      %s30 = sphi 0, %s27
      %s31 = sphi 0, %s28
      %s32 = sphi 0, %s29
      %s33 = sphi 0, %s30
      %s49 = sphi 0, %s51
      %s52 = sphi 0, %s49
      %s53 = sphi 0, %s52
      %s69 = sphi 0, %s53
      %s77 = sphi 0, %s79
      %s80 = sphi 0, %s77
      %s81 = sphi 0, %s80
      %s97 = sphi 0, %s81
      %s103 = sphi 0, %s105
      %s106 = sphi 0, %s103
      %s107 = sphi 0, %s106
      %s123 = sphi 0, %s107
      %s129 = sphi 0, %s131
      %s132 = sphi 0, %s129
      %s133 = sphi 0, %s132
      %s149 = sphi 0, %s133
      %s155 = sphi 0, %s157
      %s158 = sphi 0, %s155
      %s159 = sphi 0, %s158
      %s175 = sphi 0, %s159
      %s183 = sphi 0, %s185
      %s186 = sphi 0, %s183
      %s187 = sphi 0, %s186
      %s203 = sphi 0, %s187
    $region4: #{tpu_custom_call.1} parent=1 // loop_header_branch
      %21 = sbr.rel (%p19) target = $region8
    $region5: #{tpu_custom_call.1} parent=1 // loop_body
      %s23 = ssub.s32 %s18, 1
      %s24 = ssub.s32 %s18, 2
      %s34 = sadd.s32 1, %s27
      %p35 = scmp.ge.s32.totalorder %s34, 1
      %s36 = scalar_select %p35, 0, %s34
      %s37 = sadd.s32 1, %s26
      %s38 = scalar_select %p35, %s37, %s26
      %p39 = scmp.ge.s32.totalorder %s38, 3
      %s40 = scalar_select %p39, 0, %s38
      %s41 = sadd.s32 1, %s25
      %s42 = scalar_select %p39, %s41, %s25
      %p43 = scmp.ge.s32.totalorder %s42, 1
      %s44 = scalar_select %p43, 0, %s42
      %s45 = ssub.s32 %s25, %s44
      %s46 = ssub.s32 %s27, %s36
      %s47 = sor.u32 %s45, %s46
      %p48 = scmp.eq.s32.totalorder %s47, 0
      %s50 = sadd.s32 %s49, 1
      %s51 = scalar_select %p48, %s49, %s50
      %p54 = pneg %p48
      %p55 = scmp.eq.s32.totalorder %s18, 2
      %p56 = por %p54, %p55
      %p57 = scmp.ne.s32.totalorder %s49, %s52
      %p58 = scmp.eq.s32.totalorder %s18, 0
      %p59 = por %p57, %p58
      %p60 = scmp.ne.s32.totalorder %s49, %s52
      %p61 = scmp.eq.s32.totalorder %s23, 2
      %p62 = por %p60, %p61
      %p63 = scmp.ne.s32.totalorder %s52, %s53
      %p64 = scmp.eq.s32.totalorder %s23, 0
      %p65 = por %p63, %p64
      %p66 = scmp.ne.s32.totalorder %s52, %s53
      %p67 = scmp.eq.s32.totalorder %s24, 2
      %p68 = por %p66, %p67
      %p70 = scmp.ne.s32.totalorder %s53, %s69
      %p71 = scmp.eq.s32.totalorder %s24, 0
      %p72 = por %p70, %p71
      %s73 = ssub.s32 %s27, %s36
      %s74 = ssub.s32 %s26, %s40
      %s75 = sor.u32 %s73, %s74
      %p76 = scmp.eq.s32.totalorder %s75, 0
      %s78 = sadd.s32 %s77, 1
      %s79 = scalar_select %p76, %s77, %s78
      %p82 = pneg %p76
      %p83 = scmp.eq.s32.totalorder %s18, 2
      %p84 = por %p82, %p83
      %p85 = scmp.ne.s32.totalorder %s77, %s80
      %p86 = scmp.eq.s32.totalorder %s18, 0
      %p87 = por %p85, %p86
      %p88 = scmp.ne.s32.totalorder %s77, %s80
      %p89 = scmp.eq.s32.totalorder %s23, 2
      %p90 = por %p88, %p89
      %p91 = scmp.ne.s32.totalorder %s80, %s81
      %p92 = scmp.eq.s32.totalorder %s23, 0
      %p93 = por %p91, %p92
      %p94 = scmp.ne.s32.totalorder %s80, %s81
      %p95 = scmp.eq.s32.totalorder %s24, 2
      %p96 = por %p94, %p95
      %p98 = scmp.ne.s32.totalorder %s81, %s97
      %p99 = scmp.eq.s32.totalorder %s24, 0
      %p100 = por %p98, %p99
      %s101 = ssub.s32 %s26, %s40
      %p102 = scmp.eq.s32.totalorder %s101, 0
      %s104 = sadd.s32 %s103, 1
      %s105 = scalar_select %p102, %s103, %s104
      %p108 = pneg %p102
      %p109 = scmp.eq.s32.totalorder %s18, 2
      %p110 = por %p108, %p109
      %p111 = scmp.ne.s32.totalorder %s103, %s106
      %p112 = scmp.eq.s32.totalorder %s18, 0
      %p113 = por %p111, %p112
      %p114 = scmp.ne.s32.totalorder %s103, %s106
      %p115 = scmp.eq.s32.totalorder %s23, 2
      %p116 = por %p114, %p115
      %p117 = scmp.ne.s32.totalorder %s106, %s107
      %p118 = scmp.eq.s32.totalorder %s23, 0
      %p119 = por %p117, %p118
      %p120 = scmp.ne.s32.totalorder %s106, %s107
      %p121 = scmp.eq.s32.totalorder %s24, 2
      %p122 = por %p120, %p121
      %p124 = scmp.ne.s32.totalorder %s107, %s123
      %p125 = scmp.eq.s32.totalorder %s24, 0
      %p126 = por %p124, %p125
      %s127 = ssub.s32 %s27, %s36
      %p128 = scmp.eq.s32.totalorder %s127, 0
      %s130 = sadd.s32 %s129, 1
      %s131 = scalar_select %p128, %s129, %s130
      %p134 = pneg %p128
      %p135 = scmp.eq.s32.totalorder %s18, 2
      %p136 = por %p134, %p135
      %p137 = scmp.ne.s32.totalorder %s129, %s132
      %p138 = scmp.eq.s32.totalorder %s18, 0
      %p139 = por %p137, %p138
      %p140 = scmp.ne.s32.totalorder %s129, %s132
      %p141 = scmp.eq.s32.totalorder %s23, 2
      %p142 = por %p140, %p141
      %p143 = scmp.ne.s32.totalorder %s132, %s133
      %p144 = scmp.eq.s32.totalorder %s23, 0
      %p145 = por %p143, %p144
      %p146 = scmp.ne.s32.totalorder %s132, %s133
      %p147 = scmp.eq.s32.totalorder %s24, 2
      %p148 = por %p146, %p147
      %p150 = scmp.ne.s32.totalorder %s133, %s149
      %p151 = scmp.eq.s32.totalorder %s24, 0
      %p152 = por %p150, %p151
      %s153 = ssub.s32 %s27, %s36
      %p154 = scmp.eq.s32.totalorder %s153, 0
      %s156 = sadd.s32 %s155, 1
      %s157 = scalar_select %p154, %s155, %s156
      %p160 = pneg %p154
      %p161 = scmp.eq.s32.totalorder %s18, 2
      %p162 = por %p160, %p161
      %p163 = scmp.ne.s32.totalorder %s155, %s158
      %p164 = scmp.eq.s32.totalorder %s18, 0
      %p165 = por %p163, %p164
      %p166 = scmp.ne.s32.totalorder %s155, %s158
      %p167 = scmp.eq.s32.totalorder %s23, 2
      %p168 = por %p166, %p167
      %p169 = scmp.ne.s32.totalorder %s158, %s159
      %p170 = scmp.eq.s32.totalorder %s23, 0
      %p171 = por %p169, %p170
      %p172 = scmp.ne.s32.totalorder %s158, %s159
      %p173 = scmp.eq.s32.totalorder %s24, 2
      %p174 = por %p172, %p173
      %p176 = scmp.ne.s32.totalorder %s159, %s175
      %p177 = scmp.eq.s32.totalorder %s24, 0
      %p178 = por %p176, %p177
      %s179 = ssub.s32 %s25, %s44
      %s180 = ssub.s32 %s26, %s40
      %s181 = sor.u32 %s179, %s180
      %p182 = scmp.eq.s32.totalorder %s181, 0
      %s184 = sadd.s32 %s183, 1
      %s185 = scalar_select %p182, %s183, %s184
      %p188 = pneg %p182
      %p189 = scmp.eq.s32.totalorder %s18, 2
      %p190 = por %p188, %p189
      %p191 = scmp.ne.s32.totalorder %s183, %s186
      %p192 = scmp.eq.s32.totalorder %s18, 0
      %p193 = por %p191, %p192
      %p194 = scmp.ne.s32.totalorder %s183, %s186
      %p195 = scmp.eq.s32.totalorder %s23, 2
      %p196 = por %p194, %p195
      %p197 = scmp.ne.s32.totalorder %s186, %s187
      %p198 = scmp.eq.s32.totalorder %s23, 0
      %p199 = por %p197, %p198
      %p200 = scmp.ne.s32.totalorder %s186, %s187
      %p201 = scmp.eq.s32.totalorder %s24, 2
      %p202 = por %p200, %p201
      %p204 = scmp.ne.s32.totalorder %s187, %s203
      %p205 = scmp.eq.s32.totalorder %s24, 0
      %p206 = por %p204, %p205
      %p207 = scmp.le.s32.totalorder 1, %s18
      %p208 = scmp.lt.s32.totalorder %s18, 4
      %p209 = pnand %p207, %p208
      %p210 = pneg %p209
      // Predicated region
      $region9: #{tpu_custom_call.1} parent=5 // pred_check
        _
      $region10: #{tpu_custom_call.1} parent=5 // pred_check_branch
        %212 = sbr.rel (%p209) target = $region12
      $region11: #{tpu_custom_call.1} parent=5 // pred_region
        %s213 = ssub.s32 %s18, 1
        // Predicated region
        $region13: #{tpu_custom_call.1} parent=11 // pred_check
          %p214 = pneg %p65
        $region14: #{tpu_custom_call.1} parent=11 // pred_check_branch
          %216 = sbr.rel (%p214) target = $region16
        $region15: #{tpu_custom_call.1} parent=11 // pred_region
          %s217 = smul.u32 2, %s28
          %s219 = ssub.s32 256, 256
          %220 = vsyncadd [#allocation4], %s219
          %s221 = sadd.s32 %s30, %s217
          %s222 = smul.addr %s221, 128
          %s223 = scalar_lea.hbm %s0, %s222
          %s224 = sshll.u32 [#allocation3], 4
          %s225 = int_to_ptr.vmem [resolvable:$true] %s224
          %230 = dma.hbm_to_vmem [thread:$0]  %s223, 256, %s225, [#allocation4], 128, 128, 8
        $region16: #{tpu_custom_call.1} parent=11 // pred_fallthru
          _
        // Predicated region
        $region17: #{tpu_custom_call.1} parent=11 // pred_check
          %p231 = pneg %p145
        $region18: #{tpu_custom_call.1} parent=11 // pred_check_branch
          %233 = sbr.rel (%p231) target = $region20
        $region19: #{tpu_custom_call.1} parent=11 // pred_region
          %p234 = scmp.lt.s32.totalorder %s30, 0
          %s235 = scalar_select %p234, %s30, 0
          %s236 = scalar_lea.vmem %s3, %s235
        $region20: #{tpu_custom_call.1} parent=11 // pred_fallthru
          _
        // Predicated region
        $region21: #{tpu_custom_call.1} parent=11 // pred_check
          %p237 = pneg %p171
        $region22: #{tpu_custom_call.1} parent=11 // pred_check_branch
          %239 = sbr.rel (%p237) target = $region24
        $region23: #{tpu_custom_call.1} parent=11 // pred_region
          %p240 = scmp.lt.s32.totalorder %s30, 0
          %s241 = scalar_select %p240, %s30, 0
          %s242 = scalar_lea.vmem %s4, %s241
        $region24: #{tpu_custom_call.1} parent=11 // pred_fallthru
          _
      $region12: #{tpu_custom_call.1} parent=5 // pred_fallthru
        _
      %p243 = scmp.lt.s32.totalorder %s18, 3
      // Predicated region
      $region25: #{tpu_custom_call.1} parent=5 // pred_check
        %p244 = pneg %p243
      $region26: #{tpu_custom_call.1} parent=5 // pred_check_branch
        %246 = sbr.rel (%p244) target = $region28
      $region27: #{tpu_custom_call.1} parent=5 // pred_region
        // Predicated region
        $region29: #{tpu_custom_call.1} parent=27 // pred_check
          %p247 = pneg %p87
        $region30: #{tpu_custom_call.1} parent=27 // pred_check_branch
          %249 = sbr.rel (%p247) target = $region32
        $region31: #{tpu_custom_call.1} parent=27 // pred_region
          %s250 = sand.u32 %s77, 1
          %s251 = scalar_lea.sflag [#allocation7], %s250
          %s252 = sand.u32 %s77, 1
          %s253 = smul.addr %s252, 64
          %s254 = scalar_lea.vmem [#allocation6], %s253
          %s255 = smul.u32 16, %s27
          %s257 = ssub.s32 1024, 1024
          %258 = vsyncadd %s251, %s257
          %s259 = smul.addr %s255, 3
          %s260 = sadd.s32 %s26, %s259
          %s261 = smul.addr %s260, 64
          %s262 = scalar_lea.hbm %s1, %s261
          %s263 = sshll.u32 %s254, 4
          %s264 = int_to_ptr.vmem [resolvable:$true] %s263
          %269 = dma.hbm_to_vmem [thread:$0]  %s262, 1024, %s264, %s251, 192, 64, 4
        $region32: #{tpu_custom_call.1} parent=27 // pred_fallthru
          _
        // Predicated region
        $region33: #{tpu_custom_call.1} parent=27 // pred_check
          %p270 = pneg %p113
        $region34: #{tpu_custom_call.1} parent=27 // pred_check_branch
          %272 = sbr.rel (%p270) target = $region36
        $region35: #{tpu_custom_call.1} parent=27 // pred_region
          %p273 = scmp.lt.s32.totalorder %s26, 2
          %s274 = scalar_select %p273, %s26, 2
          %s275 = scalar_lea.vmem %s2, %s274
        $region36: #{tpu_custom_call.1} parent=27 // pred_fallthru
          _
      $region28: #{tpu_custom_call.1} parent=5 // pred_fallthru
        _
      %p276 = scmp.le.s32.totalorder 1, %s18
      %p277 = scmp.lt.s32.totalorder %s18, 4
      %p278 = pnand %p276, %p277
      %p279 = pneg %p278
      // Predicated region
      $region37: #{tpu_custom_call.1} parent=5 // pred_check
        _
      $region38: #{tpu_custom_call.1} parent=5 // pred_check_branch
        %281 = sbr.rel (%p278) target = $region40
      $region39: #{tpu_custom_call.1} parent=5 // pred_region
        %s282 = ssub.s32 %s18, 1
        // Predicated region
        $region41: #{tpu_custom_call.1} parent=39 // pred_check
          %p283 = pneg %p65
        $region42: #{tpu_custom_call.1} parent=39 // pred_check_branch
          %285 = sbr.rel (%p283) target = $region44
        $region43: #{tpu_custom_call.1} parent=39 // pred_region
          %286 = dma.done [#allocation4], 256
        $region44: #{tpu_custom_call.1} parent=39 // pred_fallthru
          _
        %s287 = sand.u32 %s80, 1
        %s288 = scalar_lea.sflag [#allocation7], %s287
        %s289 = sand.u32 %s80, 1
        %s290 = smul.addr %s289, 64
        %s291 = scalar_lea.vmem [#allocation6], %s290
        // Predicated region
        $region45: #{tpu_custom_call.1} parent=39 // pred_check
          %p292 = pneg %p93
        $region46: #{tpu_custom_call.1} parent=39 // pred_check_branch
          %294 = sbr.rel (%p292) target = $region48
        $region47: #{tpu_custom_call.1} parent=39 // pred_region
          %295 = dma.done %s288, 1024
        $region48: #{tpu_custom_call.1} parent=39 // pred_fallthru
          _
        %p296 = pneg %p65
        %p297 = pneg %p62
        %s298 = sand.u32 %s80, 1
        %s299 = scalar_lea.sflag [#allocation7], %s298
        %s300 = sand.u32 %s80, 1
        %s301 = smul.addr %s300, 64
        %s302 = scalar_lea.vmem [#allocation6], %s301
        %p303 = pneg %p93
        %p304 = pneg %p90
        %p305 = scmp.lt.s32.totalorder %s29, 2
        %s306 = scalar_select %p305, %s29, 2
        %s307 = scalar_lea.vmem %s2, %s306
        %p308 = pneg %p119
        %p309 = pneg %p116
        %p310 = scmp.lt.s32.totalorder %s30, 0
        %s311 = scalar_select %p310, %s30, 0
        %s312 = scalar_lea.vmem %s3, %s311
        %p313 = pneg %p145
        %p314 = pneg %p142
        %p315 = scmp.lt.s32.totalorder %s30, 0
        %s316 = scalar_select %p315, %s30, 0
        %s317 = scalar_lea.vmem %s4, %s316
        %p318 = pneg %p171
        %p319 = pneg %p168
        %p320 = pneg %p199
        %p321 = pneg %p196
        %s322 = sand.u32 %s186, 1
        %s323 = scalar_lea.sflag [#allocation5], %s322
        %s324 = sand.u32 %s186, 1
        %s325 = smul.addr %s324, 16
        %s326 = scalar_lea.vmem [#allocation8], %s325
        %s327 = smul.u32 2, %s28
        %s328 = smul.u32 16, %s30
        %p329 = scmp.lt.s32.totalorder %s29, 2
        %s330 = scalar_select %p329, %s29, 2
        %s331 = scalar_lea.vmem %s2, %s330
        %p332 = scmp.lt.s32.totalorder %s30, 0
        %s333 = scalar_select %p332, %s30, 0
        %s334 = scalar_lea.vmem %s3, %s333
        %p335 = scmp.lt.s32.totalorder %s30, 0
        %s336 = scalar_select %p335, %s30, 0
        %s337 = scalar_lea.vmem %s4, %s336
        %s338 = smul.u32 2, %s28
        %p340 = scmp.eq.s32.totalorder %s30, 0
        // Predicated region
        $region49: #{tpu_custom_call.1} parent=39 // pred_check
          %p341 = pneg %p340
        $region50: #{tpu_custom_call.1} parent=39 // pred_check_branch
          %343 = sbr.rel (%p341) target = $region52
        $region51: #{tpu_custom_call.1} parent=39 // pred_region
          %344 = vst [vmem:[#allocation2] sm:$0xff] 0.0
          %345 = vst [vmem:[#allocation2 + $0x8] sm:$0xff] 0.0
        $region52: #{tpu_custom_call.1} parent=39 // pred_fallthru
          _
        %v346 = vld [vmem:[#allocation3] sm:$0xff]
        %v347 = vld [vmem:[#allocation3 + $0x8] sm:$0xff]
        %348 = vadd.xlane.f32.xlu0 %v346
        %v349 = vpop.xlane.xlu0 %348
        %350 = vadd.xlane.f32.xlu0 %v347
        %v351 = vpop.xlane.xlu0 %350
        %v352 = vmul.f32 %v349, 0.03125
        %v353 = vmul.f32 %v351, 0.03125
        %v354 = vlaneseq
        %v355 = vand.u32 %v354, 127
        %vm356 = vcmp.lt.s32.totalorder %v355, 32
        %v357 = vsub.f32 %v346, %v352
        %v358 = vsub.f32 %v347, %v353
        %v359 = vsel %vm356, %v357, 0.0
        %v360 = vsel %vm356, %v358, 0.0
        %v361 = vmul.f32 %v359, %v359
        %v362 = vmul.f32 %v360, %v360
        %363 = vadd.xlane.f32.xlu0 %v361
        %v364 = vpop.xlane.xlu0 %363
        %365 = vadd.xlane.f32.xlu0 %v362
        %v366 = vpop.xlane.xlu0 %365
        %v367 = vmul.f32 %v364, 0.03125
        %v368 = vmul.f32 %v366, 0.03125
        %v369 = vadd.f32 %v367, 1e-05
        %v370 = vadd.f32 %v368, 1e-05
        %v371 = vrsqrt.pop %v369
        %v372 = vrsqrt.pop %v370
        %v373 = vmul.f32 %v359, %v371
        %v374 = vmul.f32 %v360, %v372
        %v375 = vld [vmem:[%s334] sm:$0x1]
        %v377 = vlaneseq
        %v378 = vshrl.u32 %v377, 7
        %v379 = vsub.s32 0, %v378
        %v380 = vrot.slane %v375, %v379
        %v382 = vmul.f32 %v373, %v380
        %v383 = vmul.f32 %v374, %v380
        %v384 = vld [vmem:[%s337] sm:$0x1]
        %v386 = vlaneseq
        %v387 = vshrl.u32 %v386, 7
        %v388 = vsub.s32 0, %v387
        %v389 = vrot.slane %v384, %v388
        %v391 = vadd.f32 %v382, %v389
        %v392 = vadd.f32 %v383, %v389
        %v393 = vld [vmem:[#allocation2] sm:$0xff]
        %v394 = vld [vmem:[#allocation2 + $0x8] sm:$0xff]
        %v395 = vpack.c.bf16 %v392, %v391
        %v396 = vld [vmem:[%s291] sm:$0xf]
        %v397 = vld [vmem:[%s291 + $0x4] sm:$0xf]
        %v398 = vld [vmem:[%s291 + $0x8] sm:$0xf]
        %v399 = vld [vmem:[%s291 + $0xc] sm:$0xf]
        %v400 = vld [vmem:[%s291 + $0x10] sm:$0xf]
        %v401 = vld [vmem:[%s291 + $0x14] sm:$0xf]
        %v402 = vld [vmem:[%s291 + $0x18] sm:$0xf]
        %v403 = vld [vmem:[%s291 + $0x1c] sm:$0xf]
        %v404 = vld [vmem:[%s291 + $0x20] sm:$0xf]
        %v405 = vld [vmem:[%s291 + $0x24] sm:$0xf]
        %v406 = vld [vmem:[%s291 + $0x28] sm:$0xf]
        %v407 = vld [vmem:[%s291 + $0x2c] sm:$0xf]
        %v408 = vld [vmem:[%s291 + $0x30] sm:$0xf]
        %v409 = vld [vmem:[%s291 + $0x34] sm:$0xf]
        %v410 = vld [vmem:[%s291 + $0x38] sm:$0xf]
        %v411 = vld [vmem:[%s291 + $0x3c] sm:$0xf]
        %v428 = vunpack.c.l.b16 %v396
        %v429 = vunpack.c.l.b16 %v397
        %v430 = vunpack.c.l.b16 %v398
        %v431 = vunpack.c.l.b16 %v399
        %v432 = vunpack.c.l.b16 %v400
        %v433 = vunpack.c.l.b16 %v401
        %v434 = vunpack.c.l.b16 %v402
        %v435 = vunpack.c.l.b16 %v403
        %v436 = vunpack.c.l.b16 %v404
        %v437 = vunpack.c.l.b16 %v405
        %v438 = vunpack.c.l.b16 %v406
        %v439 = vunpack.c.l.b16 %v407
        %v440 = vunpack.c.l.b16 %v408
        %v441 = vunpack.c.l.b16 %v409
        %v442 = vunpack.c.l.b16 %v410
        %v443 = vunpack.c.l.b16 %v411
        %v444 = vpack.c.b16 %v429, %v428
        %v445 = vpack.c.b16 %v431, %v430
        %v446 = vpack.c.b16 %v433, %v432
        %v447 = vpack.c.b16 %v435, %v434
        %v448 = vpack.c.b16 %v437, %v436
        %v449 = vpack.c.b16 %v439, %v438
        %v450 = vpack.c.b16 %v441, %v440
        %v451 = vpack.c.b16 %v443, %v442
        %460 = vmatprep.subr.bf16.mxu0 0
        %461 = vmatpush1.bf16.msra.mxu0 %v444
        %462 = vmatprep.subr.bf16.mxu0 0
        %463 = vmatpush1.bf16.msra.mxu0 %v445
        %464 = vmatprep.subr.bf16.mxu0 0
        %465 = vmatpush1.bf16.msra.mxu0 %v446
        %466 = vmatprep.subr.bf16.mxu0 0
        %467 = vmatpush1.bf16.msra.mxu0 %v447
        %468 = vmatprep.subr.bf16.mxu0 0
        %469 = vmatpush1.bf16.msra.mxu0 %v448
        %470 = vmatprep.subr.bf16.mxu0 0
        %471 = vmatpush1.bf16.msra.mxu0 %v449
        %472 = vmatprep.subr.bf16.mxu0 0
        %473 = vmatpush1.bf16.msra.mxu0 %v450
        %474 = vmatprep.subr.bf16.mxu0 0
        %475 = vmatpush1.bf16.msra.mxu0 %v451
        %476 = vmatprep.subr.bf16.mxu0 0
        %477 = vmatpush1.bf16.msra.mxu0 0
        %478 = vmatprep.subr.bf16.mxu0 0
        %479 = vmatpush1.bf16.msra.mxu0 0
        %480 = vmatprep.subr.bf16.mxu0 0
        %481 = vmatpush1.bf16.msra.mxu0 0
        %482 = vmatprep.subr.bf16.mxu0 0
        %483 = vmatpush1.bf16.msra.mxu0 0
        %484 = vmatprep.subr.bf16.mxu0 0
        %485 = vmatpush1.bf16.msra.mxu0 0
        %486 = vmatprep.subr.bf16.mxu0 0
        %487 = vmatpush1.bf16.msra.mxu0 0
        %488 = vmatprep.subr.bf16.mxu0 0
        %489 = vmatpush1.bf16.msra.mxu0 0
        %490 = vmatprep.subr.bf16.mxu0 0
        %491 = vmatpush1.bf16.msra.mxu0 0
        %492 = vmatprep.mubr.bf16.mxu0 0
        %493 = vmatmul.mubr.bf16.gmra.mrb[0].mxu0 %v395
        %v494 = vpop.f32.mrb[0].mxu0
        %v495 = vadd.f32 0.0, %v494
        %v496 = vpop.f32.mrb[0].mxu0
        %v497 = vpop.f32.mrb[0].mxu0
        %v498 = vadd.f32 0.0, %v497
        %v499 = vpop.f32.mrb[0].mxu0
        %500 = vdwg.mxu0
        %v501 = vadd.f32 %v393, %v495
        %v502 = vadd.f32 %v394, %v498
        %503 = vst [vmem:[#allocation2] sm:$0xff] %v501
        %504 = vst [vmem:[#allocation2 + $0x8] sm:$0xff] %v502
        // Predicated region
        $region53: #{tpu_custom_call.1} parent=39 // pred_check
          %p505 = pneg %p340
        $region54: #{tpu_custom_call.1} parent=39 // pred_check_branch
          %507 = sbr.rel (%p505) target = $region56
        $region55: #{tpu_custom_call.1} parent=39 // pred_region
          %v508 = vld [vmem:[#allocation2] sm:$0xff]
          %v509 = vld [vmem:[#allocation2 + $0x8] sm:$0xff]
          %v510 = vld [vmem:[%s331] sm:$0x1]
          %v512 = vlaneseq
          %v513 = vshrl.u32 %v512, 7
          %v514 = vsub.s32 0, %v513
          %v515 = vrot.slane %v510, %v514
          %v517 = vadd.f32 %v508, %v515
          %v518 = vadd.f32 %v509, %v515
          %519 = vst [vmem:[%s326] sm:$0xff] %v517
          %520 = vst [vmem:[%s326 + $0x8] sm:$0xff] %v518
        $region56: #{tpu_custom_call.1} parent=39 // pred_fallthru
          _
        %s521 = sand.u32 %s186, 1
        %s522 = scalar_lea.sflag [#allocation5], %s521
        %s523 = sand.u32 %s186, 1
        %s524 = smul.addr %s523, 16
        %s525 = scalar_lea.vmem [#allocation8], %s524
        // Predicated region
        $region57: #{tpu_custom_call.1} parent=39 // pred_check
          %p526 = pneg %p196
        $region58: #{tpu_custom_call.1} parent=39 // pred_check_branch
          %528 = sbr.rel (%p526) target = $region60
        $region59: #{tpu_custom_call.1} parent=39 // pred_region
          %s529 = smul.u32 2, %s28
          %s531 = ssub.s32 256, 256
          %532 = vsyncadd %s522, %s531
          %s533 = smul.addr %s529, 3
          %s534 = sadd.s32 %s29, %s533
          %s535 = smul.addr %s534, 128
          %s536 = scalar_lea.hbm %s5, %s535
          %s537 = sshll.u32 %s525, 4
          %s538 = int_to_ptr.vmem [resolvable:$true] %s537
          %543 = dma.vmem_to_hbm [thread:$0]  %s538, 256, %s536, %s522, 128, 384, 8
        $region60: #{tpu_custom_call.1} parent=39 // pred_fallthru
          _
      $region40: #{tpu_custom_call.1} parent=5 // pred_fallthru
        _
      %p544 = scmp.le.s32.totalorder 2, %s18
      // Predicated region
      $region61: #{tpu_custom_call.1} parent=5 // pred_check
        %p545 = pneg %p544
      $region62: #{tpu_custom_call.1} parent=5 // pred_check_branch
        %547 = sbr.rel (%p545) target = $region64
      $region63: #{tpu_custom_call.1} parent=5 // pred_region
        %s548 = ssub.s32 %s18, 2
        // Predicated region
        $region65: #{tpu_custom_call.1} parent=63 // pred_check
          %p549 = pneg %p202
        $region66: #{tpu_custom_call.1} parent=63 // pred_check_branch
          %551 = sbr.rel (%p549) target = $region68
        $region67: #{tpu_custom_call.1} parent=63 // pred_region
          %s552 = sand.u32 %s187, 1
          %s553 = scalar_lea.sflag [#allocation5], %s552
          %s554 = sand.u32 %s187, 1
          %s555 = smul.addr %s554, 16
          %s556 = scalar_lea.vmem [#allocation8], %s555
          %557 = dma.done %s553, 256
        $region68: #{tpu_custom_call.1} parent=63 // pred_fallthru
          _
      $region64: #{tpu_custom_call.1} parent=5 // pred_fallthru
        _
    $region6: #{tpu_custom_call.1} parent=1 // loop_footer
      %s22 = sadd.s32 1, %s18
    $region7: #{tpu_custom_call.1} parent=1 // loop_footer_branch
      %17 = sbr.rel target = $region3
    $region8: #{tpu_custom_call.1} parent=1 // loop_exit
      _
    %558 = vsyncpa [#allocation4], 1
    %s559 = scalar_lea.sflag [#allocation4], 1
    %560 = vsyncpa %s559, 1
    %561 = vsyncpa [#allocation7], 1
    %s562 = scalar_lea.sflag [#allocation7], 1
    %563 = vsyncpa %s562, 1
    %564 = vsyncpa [#allocation5], 1
    %s565 = scalar_lea.sflag [#allocation5], 1
    %566 = vsyncpa %s565, 1

</llo_original>
